<compile_context>
chip_gen: v7x
topology: tpu7x:2x2x1
jax: 0.10.0
libtpu: 0.0.40
codegen_flags: <defaults>
</compile_context>

<pallas_src>
import functools
import math

import jax
import jax.numpy as jnp
from jax import lax
from jax.experimental import pallas as pl
from jax.experimental.pallas import tpu as pltpu

# ----------------------------- config ---------------------------------------
BASE = 32            # original SD value: 320
D_CONTEXT = 64       # original SD value: 768
N_TIME = 4 * BASE    # original: 1280
N_GROUPS = 32
N_HEAD = 8

ACT_DTYPE = jnp.bfloat16           # inter-kernel activation dtype
WEIGHT_DTYPE = jnp.bfloat16        # matmul / conv weights stored in bf16


def _pick_vmem_limit():
    # 48 MiB fits v7x (64 MiB physical); use more headroom on v5e/v6e (128 MiB).
    try:
        cap = int(pltpu.get_tpu_info().vmem_capacity_bytes)
        if cap >= 100 * 1024 * 1024:
            return 100 * 1024 * 1024
    except Exception:
        pass
    return 48 * 1024 * 1024


VMEM_LIMIT = _pick_vmem_limit()


def _round_up(a, m):
    return (a + m - 1) // m * m


def _choose_tm(mp):
    for tm in (256, 128, 64, 32, 16, 8):
        if mp % tm == 0:
            return tm
    return mp


def _choose_tk(k):
    if k % 128 != 0 or k <= 512:
        return k
    for tk in (512, 384, 256, 128):
        if k % tk == 0:
            return tk
    return k


def _choose_tq(s):
    for t in (128, 64, 32, 16, 8):
        if s % t == 0:
            return t
    return s


# ----------------------------- linear / 1x1-conv kernel ---------------------
def _linear_kernel(*refs, act_in, act_out, has_bias, has_add, has_ln, nk,
                   n_splits):
    idx = 0
    x_ref = refs[idx]; idx += 1
    ln_g_ref = ln_b_ref = None
    if has_ln:
        ln_g_ref, ln_b_ref = refs[idx], refs[idx + 1]
        idx += 2
    w_ref = refs[idx]; idx += 1
    b_ref = None
    if has_bias:
        b_ref = refs[idx]; idx += 1
    add_ref = None
    if has_add:
        add_ref = refs[idx]; idx += 1
    out_refs = refs[idx:idx + n_splits]
    idx += n_splits
    acc_ref = refs[idx] if nk > 1 else None

    # ---- prologue -----------------------------------------------------------
    x = x_ref[...]
    if act_in == "silu":
        xf = x.astype(jnp.float32)
        xf = xf * jax.nn.sigmoid(xf)
        x = xf.astype(jnp.bfloat16)
    elif act_in == "layernorm":
        xf = x.astype(jnp.float32)
        mu = jnp.mean(xf, axis=-1, keepdims=True)
        var = jnp.mean(jnp.square(xf - mu), axis=-1, keepdims=True)
        xf = (xf - mu) * lax.rsqrt(var + 1e-5)
        xf = xf * ln_g_ref[...].astype(jnp.float32) \
            + ln_b_ref[...].astype(jnp.float32)
        x = xf.astype(jnp.bfloat16)
    elif x.dtype != jnp.bfloat16:
        x = x.astype(jnp.bfloat16)

    y = jnp.dot(x, w_ref[...], preferred_element_type=jnp.float32)

    # ---- epilogue -----------------------------------------------------------
    def epilogue(acc):
        if has_bias:
            acc = acc + b_ref[...].astype(jnp.float32)
        if act_out == "silu":
            acc = acc * jax.nn.sigmoid(acc)
        elif act_out == "gelu":
            acc = jax.nn.gelu(acc, approximate=False)
        elif act_out == "geglu":
            half = acc.shape[-1] // 2
            acc = acc[:, :half] * jax.nn.gelu(acc[:, half:], approximate=False)
        if has_add:
            acc = acc + add_ref[...].astype(jnp.float32)
        if n_splits == 1:
            out_refs[0][...] = acc.astype(out_refs[0].dtype)
        else:
            ns = acc.shape[-1] // n_splits
            for s, oref in enumerate(out_refs):
                oref[...] = acc[:, s * ns:(s + 1) * ns].astype(oref.dtype)

    if nk == 1:
        epilogue(y)                          # no scratch round-trip
    else:
        @pl.when(pl.program_id(2) == 0)
        def _():
            acc_ref[...] = jnp.zeros_like(acc_ref)

        acc_ref[...] += y

        @pl.when(pl.program_id(2) == nk - 1)
        def _():
            epilogue(acc_ref[...])


def pallas_linear(x, w, b=None, act_in="none", act_out="none", add=None,
                  ln=None, n_splits=1, out_dtype=None):
    """y = act_out(act_in(x) @ w + b) (+ add); x: (M, K), w: (K, N).

    ln=(gamma, beta) fuses a LayerNorm prologue; n_splits>1 returns the output
    split into equal lane-dense chunks along N (e.g. q,k,v)."""
    M, K = x.shape
    N = w.shape[1]
    Nout = N // 2 if act_out == "geglu" else N
    if out_dtype is None:
        out_dtype = ACT_DTYPE
    has_bias = b is not None
    has_add = add is not None
    has_ln = ln is not None

    Mp = _round_up(M, 8)
    tm = _choose_tm(Mp)
    tk = K if has_ln else _choose_tk(K)          # LN prologue needs full K
    nk = K // tk
    if n_splits == 1 and act_out != "geglu" and N > 1024 and N % 512 == 0:
        tn = 512                                 # TODO(synk): finer N tiling for real SD sizes on v7x
    else:
        tn = N
    nj = N // tn
    tn_out = Nout // nj

    if Mp != M:
        x = jnp.pad(x, ((0, Mp - M), (0, 0)))
        if has_add:
            add = jnp.pad(add, ((0, Mp - M), (0, 0)))

    in_specs = [pl.BlockSpec((tm, tk), lambda i, j, k: (i, k))]
    inputs = [x]
    if has_ln:
        in_specs += [pl.BlockSpec((1, K), lambda i, j, k: (0, 0)),
                     pl.BlockSpec((1, K), lambda i, j, k: (0, 0))]
        inputs += [ln[0].reshape(1, K), ln[1].reshape(1, K)]
    in_specs.append(pl.BlockSpec((tk, tn), lambda i, j, k: (k, j)))
    inputs.append(w)
    if has_bias:
        in_specs.append(pl.BlockSpec((1, tn), lambda i, j, k: (0, j)))
        inputs.append(b.reshape(1, N))
    if has_add:
        in_specs.append(pl.BlockSpec((tm, tn_out), lambda i, j, k: (i, j)))
        inputs.append(add)

    if n_splits == 1:
        out_shape = jax.ShapeDtypeStruct((Mp, Nout), out_dtype)
        out_specs = pl.BlockSpec((tm, tn_out), lambda i, j, k: (i, j))
    else:
        ns = Nout // n_splits
        out_shape = tuple(jax.ShapeDtypeStruct((Mp, ns), out_dtype)
                          for _ in range(n_splits))
        out_specs = tuple(pl.BlockSpec((tm, ns), lambda i, j, k: (i, 0))
                          for _ in range(n_splits))

    scratch = [pltpu.VMEM((tm, tn), jnp.float32)] if nk > 1 else []

    out = pl.pallas_call(
        functools.partial(_linear_kernel, act_in=act_in, act_out=act_out,
                          has_bias=has_bias, has_add=has_add, has_ln=has_ln,
                          nk=nk, n_splits=n_splits),
        out_shape=out_shape,
        grid=(Mp // tm, nj, nk),
        in_specs=in_specs,
        out_specs=out_specs,
        scratch_shapes=scratch,
        compiler_params=pltpu.CompilerParams(
            dimension_semantics=("parallel", "parallel", "arbitrary"),
            vmem_limit_bytes=VMEM_LIMIT),
    )(*inputs)

    if Mp != M:
        if n_splits == 1:
            out = out[:M]
        else:
            out = tuple(o[:M] for o in out)
    return out


# ----------------------------- stride-1 KxK conv kernel ---------------------
def _conv_kernel(*refs, kh, kw, wp, wo, ho, act, has_vec, has_add, row_group):
    x_ref, w_ref, b_ref = refs[0], refs[1], refs[2]
    idx = 3
    vec_ref = None
    if has_vec:
        vec_ref = refs[idx]; idx += 1
    add_ref = None
    if has_add:
        add_ref = refs[idx]; idx += 1
    o_ref = refs[idx]
    cout = o_ref.shape[-1]

    bias = b_ref[...].astype(jnp.float32)                  # (1, Cout)
    if has_vec:
        bias = bias + vec_ref[0].astype(jnp.float32)       # (1, Cout)

    # Loop over groups of output rows so the live f32 accumulator stays small.
    for hg in range(0, ho, row_group):
        g = min(row_group, ho - hg)
        lg = (g - 1) * wp + wo
        base = hg * wp
        acc = jnp.zeros((lg, cout), jnp.float32)
        tap = 0
        for i in range(kh):
            for j in range(kw):
                s = base + i * wp + j
                acc = acc + jnp.dot(x_ref[0, s:s + lg, :], w_ref[tap],
                                    preferred_element_type=jnp.float32)
                tap += 1
        acc = acc + bias
        if act == "silu":
            acc = acc * jax.nn.sigmoid(acc)
        # drop junk columns (slab -> packed rows) inside VMEM
        rows = [acc[r * wp:r * wp + wo, :] for r in range(g)]
        out = rows[0] if g == 1 else jnp.concatenate(rows, axis=0)
        if has_add:
            out = out + add_ref[0, hg * wo:(hg + g) * wo, :].astype(jnp.float32)
        o_ref[0, hg * wo:(hg + g) * wo, :] = out.astype(o_ref.dtype)


def _im2col(x_nhwc, kh, kw, stride, pad):
    if pad:
        x_nhwc = jnp.pad(x_nhwc, ((0, 0), (pad, pad), (pad, pad), (0, 0)))
    _, Hp, Wp, _ = x_nhwc.shape
    Ho = (Hp - kh) // stride + 1
    Wo = (Wp - kw) // stride + 1
    cols = []
    for i in range(kh):
        for j in range(kw):
            cols.append(x_nhwc[:, i:i + stride * Ho:stride,
                               j:j + stride * Wo:stride, :])
    return jnp.concatenate(cols, axis=-1), Ho, Wo


def conv2d(x, p, stride=1, padding=0, act="none", vec=None, add=None):
    """x: (B, H, W, Cin) NHWC; p['w']: (kh, kw, Cin, Cout). Returns NHWC."""
    w, b = p["w"], p["b"]
    kh, kw, cin, cout = w.shape
    B, H, W_, _ = x.shape

    if stride != 1:
        # TODO(synk): the 3 stride-2 downsampling convs still use a JAX-side
        # im2col feeding the Pallas matmul (vec/add unused on this path).
        patches, Ho, Wo = _im2col(x, kh, kw, stride, padding)
        y = pallas_linear(patches.reshape(B * Ho * Wo, kh * kw * cin),
                          w.reshape(kh * kw * cin, cout), b, act_out=act)
        return y.reshape(B, Ho, Wo, cout)

    if kh == 1 and kw == 1:
        y = pallas_linear(
            x.reshape(B * H * W_, cin), w.reshape(cin, cout), b, act_out=act,
            add=None if add is None else add.reshape(B * H * W_, cout))
        return y.reshape(B, H, W_, cout)

    # stride-1 KxK conv: fused shifted-slab matmul kernel (no HBM im2col,
    # bias / time-vector / SiLU / residual / junk-column cleanup all fused).
    xp = jnp.pad(x, ((0, 0), (padding, padding), (padding, padding), (0, 0)))
    Hp, Wp = H + 2 * padding, W_ + 2 * padding
    Ho, Wo = Hp - kh + 1, Wp - kw + 1
    x_flat = xp.reshape(B, Hp * Wp, cin)
    wk = w.reshape(kh * kw, cin, cout)
    has_vec = vec is not None
    has_add = add is not None

    # keep the live f32 accumulator below ~96 KB
    max_rows = max(Wo, 24576 // max(cout, 1))
    row_group = max(1, min(Ho, (max_rows - Wo) // Wp + 1))

    in_specs = [pl.BlockSpec((1, Hp * Wp, cin), lambda n: (n, 0, 0)),
                pl.BlockSpec((kh * kw, cin, cout), lambda n: (0, 0, 0)),
                pl.BlockSpec((1, cout), lambda n: (0, 0))]
    inputs = [x_flat, wk, b.reshape(1, cout)]
    if has_vec:
        in_specs.append(pl.BlockSpec((1, 1, cout), lambda n: (n, 0, 0)))
        inputs.append(vec.reshape(B, 1, cout))
    if has_add:
        in_specs.append(pl.BlockSpec((1, Ho * Wo, cout), lambda n: (n, 0, 0)))
        inputs.append(add.reshape(B, Ho * Wo, cout))

    # TODO(synk): grid=(B,) only; add an output-row grid axis for v7x B=1 case.
    y = pl.pallas_call(
        functools.partial(_conv_kernel, kh=kh, kw=kw, wp=Wp, wo=Wo, ho=Ho,
                          act=act, has_vec=has_vec, has_add=has_add,
                          row_group=row_group),
        out_shape=jax.ShapeDtypeStruct((B, Ho * Wo, cout), ACT_DTYPE),
        grid=(B,),
        in_specs=in_specs,
        out_specs=pl.BlockSpec((1, Ho * Wo, cout), lambda n: (n, 0, 0)),
        compiler_params=pltpu.CompilerParams(
            dimension_semantics=("parallel",),
            vmem_limit_bytes=VMEM_LIMIT),
    )(*inputs)
    return y.reshape(B, Ho, Wo, cout)


# ----------------------------- GroupNorm kernel -----------------------------
def _groupnorm_kernel(x_ref, g_ref, b_ref, o_ref, *, groups, eps, silu):
    x = x_ref[0].astype(jnp.float32)                     # (HW, C)
    hw, c = x.shape
    cg = c // groups
    # one-hot channel->group aggregation matrices (built from iotas)
    c_ids = lax.broadcasted_iota(jnp.int32, (c, groups), 0)
    g_ids = lax.broadcasted_iota(jnp.int32, (c, groups), 1)
    agg = (c_ids // cg == g_ids).astype(jnp.float32)     # (C, G)
    g_ids2 = lax.broadcasted_iota(jnp.int32, (groups, c), 0)
    c_ids2 = lax.broadcasted_iota(jnp.int32, (groups, c), 1)
    agg_t = (c_ids2 // cg == g_ids2).astype(jnp.float32)  # (G, C)

    s1 = jnp.sum(x, axis=0, keepdims=True)               # (1, C)
    s2 = jnp.sum(x * x, axis=0, keepdims=True)
    gs1 = jnp.dot(s1, agg, preferred_element_type=jnp.float32)   # (1, G)
    gs2 = jnp.dot(s2, agg, preferred_element_type=jnp.float32)
    cnt = float(hw * cg)
    mean_g = gs1 / cnt
    var_g = jnp.maximum(gs2 / cnt - mean_g * mean_g, 0.0)
    inv_g = lax.rsqrt(var_g + eps)
    mean_c = jnp.dot(mean_g, agg_t, preferred_element_type=jnp.float32)  # (1, C)
    inv_c = jnp.dot(inv_g, agg_t, preferred_element_type=jnp.float32)

    gamma = g_ref[...].astype(jnp.float32)
    beta = b_ref[...].astype(jnp.float32)
    scale = inv_c * gamma
    shift = beta - mean_c * scale
    y = x * scale + shift
    if silu:
        y = y * jax.nn.sigmoid(y)
    o_ref[0] = y.astype(o_ref.dtype)


def pallas_groupnorm(x, gamma, beta, num_groups, eps=1e-5, silu=False):
    """x: (B, H, W, C) NHWC -> (B, H, W, C)."""
    B, H, W_, C = x.shape
    HW = H * W_
    y = pl.pallas_call(
        functools.partial(_groupnorm_kernel, groups=num_groups, eps=eps,
                          silu=silu),
        out_shape=jax.ShapeDtypeStruct((B, HW, C), ACT_DTYPE),
        grid=(B,),
        in_specs=[pl.BlockSpec((1, HW, C), lambda n: (n, 0, 0)),
                  pl.BlockSpec((1, C), lambda n: (0, 0)),
                  pl.BlockSpec((1, C), lambda n: (0, 0))],
        out_specs=pl.BlockSpec((1, HW, C), lambda n: (n, 0, 0)),
        compiler_params=pltpu.CompilerParams(
            dimension_semantics=("parallel",), vmem_limit_bytes=VMEM_LIMIT),
    )(x.reshape(B, HW, C), gamma.reshape(1, C), beta.reshape(1, C))
    return y.reshape(B, H, W_, C)


# ----------------------------- attention kernel ------------------------------
def _attention_kernel(q_ref, k_ref, v_ref, o_ref, *, n_head, scale):
    c = q_ref.shape[-1]
    dh = c // n_head
    # fold 1/sqrt(dh) into q once (bf16 matmul operand)
    q = (q_ref[0].astype(jnp.float32) * scale).astype(jnp.bfloat16)  # (tq, C)
    outs = []
    for h in range(n_head):
        lo, hi = h * dh, (h + 1) * dh
        q_h = q[:, lo:hi]                                  # (tq, dh)
        k_h = k_ref[0, :, lo:hi]                           # (Sk, dh)
        v_h = v_ref[0, :, lo:hi]                           # (Sk, dh)
        s = lax.dot_general(q_h, k_h, (((1,), (1,)), ((), ())),
                            preferred_element_type=jnp.float32)  # (tq, Sk)
        s = s - jnp.max(s, axis=-1, keepdims=True)
        p = jnp.exp(s)
        p = p * pl.reciprocal(jnp.sum(p, axis=-1, keepdims=True), approx=True)
        outs.append(jnp.dot(p.astype(jnp.bfloat16), v_h,
                            preferred_element_type=jnp.float32))
    o = jnp.concatenate(outs, axis=-1)                     # (tq, C)
    o_ref[0] = o.astype(o_ref.dtype)


def pallas_attention(q, k, v, n_head):
    """q: (B, Sq, C); k, v: (B, Sk, C). Lane-dense, heads split in-kernel."""
    B, Sq, C = q.shape
    Sk = k.shape[1]
    dh = C // n_head
    scale = 1.0 / math.sqrt(dh)
    tq = _choose_tq(Sq)
    return pl.pallas_call(
        functools.partial(_attention_kernel, n_head=n_head, scale=scale),
        out_shape=jax.ShapeDtypeStruct((B, Sq, C), ACT_DTYPE),
        grid=(B, Sq // tq),
        in_specs=[pl.BlockSpec((1, tq, C), lambda b, t: (b, t, 0)),
                  pl.BlockSpec((1, Sk, C), lambda b, t: (b, 0, 0)),
                  pl.BlockSpec((1, Sk, C), lambda b, t: (b, 0, 0))],
        out_specs=pl.BlockSpec((1, tq, C), lambda b, t: (b, t, 0)),
        compiler_params=pltpu.CompilerParams(
            dimension_semantics=("parallel", "parallel"),
            vmem_limit_bytes=VMEM_LIMIT),
    )(q, k, v)


# ----------------------------- deterministic params -------------------------
class ParamGen:
    def __init__(self, seed=0):
        self._key = jax.random.PRNGKey(seed)

    def normal(self, shape, scale, dtype=jnp.float32):
        self._key, sub = jax.random.split(self._key)
        return (jax.random.normal(sub, shape, jnp.float32) * scale).astype(dtype)

    def linear(self, d_in, d_out, bias=True):
        return {"w": self.normal((d_in, d_out), 1.0 / math.sqrt(d_in),
                                 WEIGHT_DTYPE),
                "b": self.normal((d_out,), 0.01) if bias else None}

    def conv(self, c_in, c_out, k):
        return {"w": self.normal((k, k, c_in, c_out),
                                 1.0 / math.sqrt(k * k * c_in), WEIGHT_DTYPE),
                "b": self.normal((c_out,), 0.01)}

    def norm(self, c):
        return {"g": jnp.ones((c,), jnp.float32) + self.normal((c,), 0.05),
                "b": self.normal((c,), 0.05)}


def init_residual_block(g, cin, cout):
    return {"type": "res",
            "p": {"gn_feat": g.norm(cin),
                  "conv_feat": g.conv(cin, cout, 3),
                  "lin_time": g.linear(N_TIME, cout),
                  "gn_merged": g.norm(cout),
                  "conv_merged": g.conv(cout, cout, 3),
                  "residual": None if cin == cout else g.conv(cin, cout, 1)}}


def init_attention_block(g, n_head, n_embd, d_context=D_CONTEXT):
    c = n_head * n_embd
    return {"type": "attn", "n_head": n_head,
            "p": {"gn": g.norm(c),
                  "conv_in": g.conv(c, c, 1),
                  "ln1": g.norm(c),
                  "attn1_in": g.linear(c, 3 * c, bias=False),
                  "attn1_out": g.linear(c, c),
                  "ln2": g.norm(c),
                  "attn2_q": g.linear(c, c, bias=False),
                  "attn2_kv": g.linear(d_context, 2 * c, bias=False),
                  "attn2_out": g.linear(c, c),
                  "ln3": g.norm(c),
                  "geglu1": g.linear(c, 4 * c * 2),
                  "geglu2": g.linear(4 * c, c),
                  "conv_out": g.conv(c, c, 1)}}


def init_conv_layer(g, cin, cout, k, stride, pad):
    return {"type": "conv", "stride": stride, "pad": pad, "p": g.conv(cin, cout, k)}


def init_upsample(g, c):
    return {"type": "upsample", "p": g.conv(c, c, 3)}


def init_unet(g):
    c1, c2, c3 = BASE, 2 * BASE, 4 * BASE
    h = N_HEAD
    enc = [
        [init_conv_layer(g, 4, c1, 3, 1, 1)],
        [init_residual_block(g, c1, c1), init_attention_block(g, h, c1 // h)],
        [init_residual_block(g, c1, c1), init_attention_block(g, h, c1 // h)],
        [init_conv_layer(g, c1, c1, 3, 2, 1)],
        [init_residual_block(g, c1, c2), init_attention_block(g, h, c2 // h)],
        [init_residual_block(g, c2, c2), init_attention_block(g, h, c2 // h)],
        [init_conv_layer(g, c2, c2, 3, 2, 1)],
        [init_residual_block(g, c2, c3), init_attention_block(g, h, c3 // h)],
        [init_residual_block(g, c3, c3), init_attention_block(g, h, c3 // h)],
        [init_conv_layer(g, c3, c3, 3, 2, 1)],
        [init_residual_block(g, c3, c3)],
        [init_residual_block(g, c3, c3)],
    ]
    bottleneck = [init_residual_block(g, c3, c3),
                  init_attention_block(g, h, c3 // h),
                  init_residual_block(g, c3, c3)]
    dec = [
        [init_residual_block(g, 2 * c3, c3)],
        [init_residual_block(g, 2 * c3, c3)],
        [init_residual_block(g, 2 * c3, c3), init_upsample(g, c3)],
        [init_residual_block(g, 2 * c3, c3), init_attention_block(g, h, c3 // h)],
        [init_residual_block(g, 2 * c3, c3), init_attention_block(g, h, c3 // h)],
        [init_residual_block(g, c3 + c2, c3), init_attention_block(g, h, c3 // h),
         init_upsample(g, c3)],
        [init_residual_block(g, c3 + c2, c2), init_attention_block(g, h, c2 // h)],
        [init_residual_block(g, 2 * c2, c2), init_attention_block(g, h, c2 // h)],
        [init_residual_block(g, c2 + c1, c2), init_attention_block(g, h, c2 // h),
         init_upsample(g, c2)],
        [init_residual_block(g, c2 + c1, c1), init_attention_block(g, h, c1 // h)],
        [init_residual_block(g, 2 * c1, c1), init_attention_block(g, h, c1 // h)],
        [init_residual_block(g, 2 * c1, c1), init_attention_block(g, h, c1 // h)],
    ]
    return {"encoders": enc, "bottleneck": bottleneck, "decoders": dec}


def init_diffusion(seed=0):
    g = ParamGen(seed)
    return {"time_embedding": {"l1": g.linear(BASE, 4 * BASE),
                               "l2": g.linear(4 * BASE, 4 * BASE)},
            "unet": init_unet(g),
            "final": {"gn": g.norm(BASE), "conv": g.conv(BASE, 4, 3)}}


# ----------------------------- jitted block forwards -------------------------
@jax.jit
def _time_embedding_fwd(p, t):
    t = pallas_linear(t, p["l1"]["w"], p["l1"]["b"], act_out="silu")
    return pallas_linear(t, p["l2"]["w"], p["l2"]["b"])


@jax.jit
def _residual_block_fwd(p, feature, time):
    # feature: (B, H, W, Cin) NHWC;  time: (1, N_TIME)
    B = feature.shape[0]
    h = pallas_groupnorm(feature, p["gn_feat"]["g"], p["gn_feat"]["b"],
                         N_GROUPS, eps=1e-5, silu=True)
    # time = linear_time(silu(time)) fused as act_in
    t = pallas_linear(time, p["lin_time"]["w"], p["lin_time"]["b"],
                      act_in="silu")
    t = jnp.broadcast_to(t, (B, t.shape[-1]))
    if p["residual"] is None:
        res = feature
    else:
        res = conv2d(feature, p["residual"], stride=1, padding=0)
    # conv_feat with the broadcast time vector fused into the epilogue
    h = conv2d(h, p["conv_feat"], stride=1, padding=1, vec=t)
    h = pallas_groupnorm(h, p["gn_merged"]["g"], p["gn_merged"]["b"],
                         N_GROUPS, eps=1e-5, silu=True)
    # conv_merged with the residual fused into the epilogue
    return conv2d(h, p["conv_merged"], stride=1, padding=1, add=res)


@functools.partial(jax.jit, static_argnames=("n_head",))
def _attention_block_fwd(p, x, context, n_head):
    # x: (B, H, W, C) NHWC
    B, H, W_, C = x.shape
    S = H * W_
    residue_long = x

    h = pallas_groupnorm(x, p["gn"]["g"], p["gn"]["b"], N_GROUPS, eps=1e-6)
    h = conv2d(h, p["conv_in"], stride=1, padding=0)           # 1x1
    xs = h.reshape(B * S, C)

    # ---- self-attention: LN fused into the QKV projection (3 lane-dense outs),
    #      residual add fused into the output projection ----
    res = xs
    q, k, v = pallas_linear(res, p["attn1_in"]["w"], None,
                            act_in="layernorm",
                            ln=(p["ln1"]["g"], p["ln1"]["b"]), n_splits=3)
    o = pallas_attention(q.reshape(B, S, C), k.reshape(B, S, C),
                         v.reshape(B, S, C), n_head)
    xs = pallas_linear(o.reshape(B * S, C), p["attn1_out"]["w"],
                       p["attn1_out"]["b"], add=res)

    # ---- cross-attention: LN fused into q projection, fused k/v projection --
    res = xs
    Bc, Sc, Dc = context.shape
    q = pallas_linear(res, p["attn2_q"]["w"], None, act_in="layernorm",
                      ln=(p["ln2"]["g"], p["ln2"]["b"]))
    kk, vv = pallas_linear(context.reshape(Bc * Sc, Dc), p["attn2_kv"]["w"],
                           None, n_splits=2)
    o = pallas_attention(q.reshape(B, S, C), kk.reshape(Bc, Sc, C),
                         vv.reshape(Bc, Sc, C), n_head)
    xs = pallas_linear(o.reshape(B * S, C), p["attn2_out"]["w"],
                       p["attn2_out"]["b"], add=res)

    # ---- GEGLU feed-forward: LN fused into geglu1, residual into geglu2 ----
    res = xs
    gg = pallas_linear(res, p["geglu1"]["w"], p["geglu1"]["b"],
                       act_in="layernorm", ln=(p["ln3"]["g"], p["ln3"]["b"]),
                       act_out="geglu")
    xs = pallas_linear(gg, p["geglu2"]["w"], p["geglu2"]["b"], add=res)

    # ---- output projection (1x1) with long residual fused ----
    return conv2d(xs.reshape(B, H, W_, C), p["conv_out"], stride=1, padding=0,
                  add=residue_long)


@functools.partial(jax.jit, static_argnames=("stride", "padding"))
def _conv_layer_fwd(p, x, stride, padding):
    return conv2d(x, p, stride=stride, padding=padding)


@jax.jit
def _upsample_fwd(p, x):
    x = jnp.repeat(jnp.repeat(x, 2, axis=1), 2, axis=2)        # nearest x2, NHWC
    return conv2d(x, p, stride=1, padding=1)


@jax.jit
def _final_fwd(p, x):
    x = pallas_groupnorm(x, p["gn"]["g"], p["gn"]["b"], N_GROUPS,
                         eps=1e-5, silu=True)
    return conv2d(x, p["conv"], stride=1, padding=1)


# ----------------------------- forward pass ----------------------------------
def apply_layer(layer, x, context, time):
    kind = layer["type"]
    if kind == "res":
        return _residual_block_fwd(layer["p"], x, time)
    if kind == "attn":
        return _attention_block_fwd(layer["p"], x, context,
                                    n_head=layer["n_head"])
    if kind == "conv":
        return _conv_layer_fwd(layer["p"], x, stride=layer["stride"],
                               padding=layer["pad"])
    if kind == "upsample":
        return _upsample_fwd(layer["p"], x)
    raise ValueError(kind)


def apply_unet(p, x, context, time):
    skips = []
    for block in p["encoders"]:
        for layer in block:
            x = apply_layer(layer, x, context, time)
        skips.append(x)
    for layer in p["bottleneck"]:
        x = apply_layer(layer, x, context, time)
    for block in p["decoders"]:
        x = jnp.concatenate([x, skips.pop()], axis=-1)         # channel concat
        for layer in block:
            x = apply_layer(layer, x, context, time)
    return x


def diffusion_forward(params, latent, context, time):
    """latent: (B, 4, H, W) NCHW; context: (B, S, D_CONTEXT); time: (1, BASE)."""
    t = _time_embedding_fwd(params["time_embedding"], time)
    x = jnp.transpose(latent, (0, 2, 3, 1)).astype(ACT_DTYPE)  # NCHW -> NHWC
    context = context.astype(ACT_DTYPE)
    x = apply_unet(params["unet"], x, context, t)
    x = _final_fwd(params["final"], x)
    return jnp.transpose(x, (0, 3, 1, 2)).astype(jnp.float32)  # NHWC -> NCHW


# ----------------------------- main ------------------------------------------
if __name__ == "__main__":
    key = jax.random.PRNGKey(0)
    k1, k2, k3 = jax.random.split(key, 3)
    B, H, W, SEQ = 2, 16, 16, 8
    latent = jax.random.normal(k1, (B, 4, H, W), jnp.float32)
    context = jax.random.normal(k2, (B, SEQ, D_CONTEXT), jnp.float32)
    time = jax.random.normal(k3, (1, BASE), jnp.float32)

    params = init_diffusion(seed=0)
    out = diffusion_forward(params, latent, context, time)
    out = jax.block_until_ready(out)

    assert out.shape == (B, 4, H, W), out.shape
    assert bool(jnp.all(jnp.isfinite(out)))
    print("KERNEL_OK")
</pallas_src>

<mosaic_0001>
module attributes {stable_mosaic.version = 11 : i64} {
  func.func @_linear_kernel(%arg0: i32, %arg1: i32, %arg2: i32, %arg3: memref<8x128xbf16, #tpu.memory_space<vmem>>, %arg4: memref<128x128xbf16, #tpu.memory_space<vmem>>, %arg5: memref<1x128xf32, #tpu.memory_space<vmem>>, %arg6: memref<8x128xbf16, #tpu.memory_space<vmem>>) attributes {dimension_semantics = [#tpu.dimension_semantics<parallel>, #tpu.dimension_semantics<parallel>, #tpu.dimension_semantics<arbitrary>], iteration_bounds = array<i64: 1, 1, 1>, scalar_prefetch = 0 : i64, scratch_operands = 0 : i64, tpu.core_type = #tpu.core_type<tc>, window_params = [{transform_indices = @transform_0, window_bounds = array<i64: 8, 128>}, {transform_indices = @transform_1, window_bounds = array<i64: 128, 128>}, {transform_indices = @transform_2, window_bounds = array<i64: 1, 128>}, {transform_indices = @transform_3, window_bounds = array<i64: 8, 128>}]} {
    %c0 = arith.constant 0 : index
    %c0_0 = arith.constant 0 : index
    %0 = vector.load %arg3[%c0, %c0_0] : memref<8x128xbf16, #tpu.memory_space<vmem>>, vector<8x128xbf16>
    %c0_1 = arith.constant 0 : index
    %c0_2 = arith.constant 0 : index
    %1 = vector.load %arg4[%c0_1, %c0_2] : memref<128x128xbf16, #tpu.memory_space<vmem>>, vector<128x128xbf16>
    %cst = arith.constant dense<0.000000e+00> : vector<8x128xf32>
    %2 = tpu.matmul %0, %1, %cst {dimension_numbers = #tpu.dot_dimension_numbers<[1], [0], [0], [1], [0, 0, 1, 1], [], []>} : vector<8x128xbf16>, vector<128x128xbf16>, vector<8x128xf32> -> vector<8x128xf32>
    %c0_3 = arith.constant 0 : index
    %c0_4 = arith.constant 0 : index
    %3 = vector.load %arg5[%c0_3, %c0_4] : memref<1x128xf32, #tpu.memory_space<vmem>>, vector<1x128xf32>
    %4 = vector.broadcast %3 : vector<1x128xf32> to vector<8x128xf32>
    %5 = arith.addf %2, %4 : vector<8x128xf32>
    %6 = arith.truncf %5 : vector<8x128xf32> to vector<8x128xbf16>
    %c0_5 = arith.constant 0 : index
    %c0_6 = arith.constant 0 : index
    %7 = vector.load %arg6[%c0_5, %c0_6] : memref<8x128xbf16, #tpu.memory_space<vmem>>, vector<8x128xbf16>
    tpu.vector_store %arg6[%c0_5, %c0_6], %6 {strides = array<i32>} : memref<8x128xbf16, #tpu.memory_space<vmem>>, vector<8x128xbf16>,
    return
  }
  func.func @transform_0(%arg0: i32, %arg1: i32, %arg2: i32) -> (i32, i32) {
    %c0_i32 = arith.constant 0 : i32
    return %arg0, %arg2 : i32, i32
  }
  func.func @transform_1(%arg0: i32, %arg1: i32, %arg2: i32) -> (i32, i32) {
    %c0_i32 = arith.constant 0 : i32
    return %arg2, %arg1 : i32, i32
  }
  func.func @transform_2(%arg0: i32, %arg1: i32, %arg2: i32) -> (i32, i32) {
    %c0_i32 = arith.constant 0 : i32
    %c0_i32_0 = arith.constant 0 : i32
    return %c0_i32, %arg1 : i32, i32
  }
  func.func @transform_3(%arg0: i32, %arg1: i32, %arg2: i32) -> (i32, i32) {
    %c0_i32 = arith.constant 0 : i32
    return %arg0, %arg1 : i32, i32
  }
}

module attributes {stable_mosaic.version = 11 : i64} {
  func.func @_linear_kernel(%arg0: i32, %arg1: i32, %arg2: i32, %arg3: memref<8x32xf32, #tpu.memory_space<vmem>>, %arg4: memref<32x128xbf16, #tpu.memory_space<vmem>>, %arg5: memref<1x128xf32, #tpu.memory_space<vmem>>, %arg6: memref<8x128xbf16, #tpu.memory_space<vmem>>) attributes {dimension_semantics = [#tpu.dimension_semantics<parallel>, #tpu.dimension_semantics<parallel>, #tpu.dimension_semantics<arbitrary>], iteration_bounds = array<i64: 1, 1, 1>, scalar_prefetch = 0 : i64, scratch_operands = 0 : i64, tpu.core_type = #tpu.core_type<tc>, window_params = [{transform_indices = @transform_0, window_bounds = array<i64: 8, 32>}, {transform_indices = @transform_1, window_bounds = array<i64: 32, 128>}, {transform_indices = @transform_2, window_bounds = array<i64: 1, 128>}, {transform_indices = @transform_3, window_bounds = array<i64: 8, 128>}]} {
    %c0 = arith.constant 0 : index
    %c0_0 = arith.constant 0 : index
    %0 = vector.load %arg3[%c0, %c0_0] : memref<8x32xf32, #tpu.memory_space<vmem>>, vector<8x32xf32>
    %1 = arith.truncf %0 : vector<8x32xf32> to vector<8x32xbf16>
    %c0_1 = arith.constant 0 : index
    %c0_2 = arith.constant 0 : index
    %2 = vector.load %arg4[%c0_1, %c0_2] : memref<32x128xbf16, #tpu.memory_space<vmem>>, vector<32x128xbf16>
    %cst = arith.constant dense<0.000000e+00> : vector<8x128xf32>
    %3 = tpu.matmul %1, %2, %cst {dimension_numbers = #tpu.dot_dimension_numbers<[1], [0], [0], [1], [0, 0, 1, 1], [], []>} : vector<8x32xbf16>, vector<32x128xbf16>, vector<8x128xf32> -> vector<8x128xf32>
    %c0_3 = arith.constant 0 : index
    %c0_4 = arith.constant 0 : index
    %4 = vector.load %arg5[%c0_3, %c0_4] : memref<1x128xf32, #tpu.memory_space<vmem>>, vector<1x128xf32>
    %5 = vector.broadcast %4 : vector<1x128xf32> to vector<8x128xf32>
    %6 = arith.addf %3, %5 : vector<8x128xf32>
    %7 = arith.negf %6 : vector<8x128xf32>
    %8 = math.exp %7 : vector<8x128xf32>
    %cst_5 = arith.constant 1.000000e+00 : f32
    %9 = vector.broadcast %cst_5 : f32 to vector<8x128xf32>
    %10 = arith.addf %9, %8 : vector<8x128xf32>
    %11 = arith.divf %9, %10 : vector<8x128xf32>
    %12 = arith.mulf %6, %11 : vector<8x128xf32>
    %13 = arith.truncf %12 : vector<8x128xf32> to vector<8x128xbf16>
    %c0_6 = arith.constant 0 : index
    %c0_7 = arith.constant 0 : index
    %14 = vector.load %arg6[%c0_6, %c0_7] : memref<8x128xbf16, #tpu.memory_space<vmem>>, vector<8x128xbf16>
    tpu.vector_store %arg6[%c0_6, %c0_7], %13 {strides = array<i32>} : memref<8x128xbf16, #tpu.memory_space<vmem>>, vector<8x128xbf16>,
    return
  }
  func.func @transform_0(%arg0: i32, %arg1: i32, %arg2: i32) -> (i32, i32) {
    %c0_i32 = arith.constant 0 : i32
    return %arg0, %arg2 : i32, i32
  }
  func.func @transform_1(%arg0: i32, %arg1: i32, %arg2: i32) -> (i32, i32) {
    %c0_i32 = arith.constant 0 : i32
    return %arg2, %arg1 : i32, i32
  }
  func.func @transform_2(%arg0: i32, %arg1: i32, %arg2: i32) -> (i32, i32) {
    %c0_i32 = arith.constant 0 : i32
    %c0_i32_0 = arith.constant 0 : i32
    return %c0_i32, %arg1 : i32, i32
  }
  func.func @transform_3(%arg0: i32, %arg1: i32, %arg2: i32) -> (i32, i32) {
    %c0_i32 = arith.constant 0 : i32
    return %arg0, %arg1 : i32, i32
  }
}

</mosaic_0001>

<llo_original>
// kernel: _time_embedding_fwd.2
$region0: #{_time_embedding_fwd.2}
  #allocation0 [shape = 'u32[]', space=smem, size = 0x4, offset = 0x4, fixed_abs, tag = 'smem constant byte address 0x4 - core index']
  #allocation1 [shape = 'u32[144,128]{1,0:T(1,128)}', space=vmem, size = 0x12000, scoped, tag = 'internal scratch']
  %s0 = inlined_call_operand.vmem [shape: f32[8,32], index: 0, kind: input, shape index: {}]
  %s1 = inlined_call_operand.hbm [shape: bf16[32,128], index: 1, kind: input, shape index: {}]
  %s2 = inlined_call_operand.hbm [shape: f32[1,128], index: 2, kind: input, shape index: {}]
  %s3 = inlined_call_operand.vmem [shape: bf16[8,128], index: 3, kind: output, shape index: {}]
  %s4 = sld [smem:[#allocation0]]
  $region30: #{_time_embedding_fwd.2} parent=0
    _
  %s6 = ssub.s32 1, %s4
  %s7 = scalar_select 0, %s6, %s4
  $region1: #{_time_embedding_fwd.2} parent=0
    #allocation2 [shape = 'u8[8192]{0}', space=vmem, size = 0x2000, scoped, tag = 'input window, operand 1, single buffered']
    #allocation3 [shape = 's32[1]{0}', space=sflag, size = 0x4, scoped, tag = 'scoped memory for _time_embedding_fwd.2']
    #allocation4 [shape = 'u8[512]{0}', space=vmem, size = 0x400, scoped, tag = 'input window, operand 2, single buffered']
    #allocation5 [shape = 's32[1]{0}', space=sflag, size = 0x4, scoped, tag = 'scoped memory for _time_embedding_fwd.2']
    %8 = vsyncpa [#allocation3], 0
    %9 = vsyncpa [#allocation5], 0
    // Predicated region
    $region2: #{_time_embedding_fwd.2} parent=1 // pred_check
      _
    $region3: #{_time_embedding_fwd.2} parent=1 // pred_check_branch
      %11 = sbr.rel (0) target = $region5
    $region4: #{_time_embedding_fwd.2} parent=1 // pred_region
      _
    $region5: #{_time_embedding_fwd.2} parent=1 // pred_fallthru
      _
    // Predicated region
    $region6: #{_time_embedding_fwd.2} parent=1 // pred_check
      _
    $region7: #{_time_embedding_fwd.2} parent=1 // pred_check_branch
      %13 = sbr.rel (0) target = $region9
    $region8: #{_time_embedding_fwd.2} parent=1 // pred_region
      %s15 = ssub.s32 256, 256
      %16 = vsyncadd [#allocation3], %s15
      %s17 = sshll.u32 [#allocation2], 4
      %s18 = int_to_ptr.vmem [resolvable:$true] %s17
      %23 = dma.hbm_to_vmem [thread:$0]  %s1, 256, %s18, [#allocation3], 64, 64, 4
    $region9: #{_time_embedding_fwd.2} parent=1 // pred_fallthru
      _
    // Predicated region
    $region10: #{_time_embedding_fwd.2} parent=1 // pred_check
      _
    $region11: #{_time_embedding_fwd.2} parent=1 // pred_check_branch
      %25 = sbr.rel (0) target = $region13
    $region12: #{_time_embedding_fwd.2} parent=1 // pred_region
      %s27 = ssub.s32 16, 16
      %28 = vsyncadd [#allocation5], %s27
      %s30 = sshll.u32 [#allocation4], 4
      %s31 = int_to_ptr.vmem [resolvable:$true] %s30
      %33 = dma.hbm_to_vmem [thread:$0]  %s2, 16, %s31, [#allocation5]
    $region13: #{_time_embedding_fwd.2} parent=1 // pred_fallthru
      _
    // Predicated region
    $region14: #{_time_embedding_fwd.2} parent=1 // pred_check
      _
    $region15: #{_time_embedding_fwd.2} parent=1 // pred_check_branch
      %35 = sbr.rel (0) target = $region17
    $region16: #{_time_embedding_fwd.2} parent=1 // pred_region
      %36 = dma.done [#allocation3], 256
    $region17: #{_time_embedding_fwd.2} parent=1 // pred_fallthru
      _
    // Predicated region
    $region18: #{_time_embedding_fwd.2} parent=1 // pred_check
      _
    $region19: #{_time_embedding_fwd.2} parent=1 // pred_check_branch
      %38 = sbr.rel (0) target = $region21
    $region20: #{_time_embedding_fwd.2} parent=1 // pred_region
      %39 = dma.done [#allocation5], 16
    $region21: #{_time_embedding_fwd.2} parent=1 // pred_fallthru
      _
    %v41 = vld [vmem:[%s0] sm:$0xff]
    %v42 = vpack.c.bf16 %v41, %v41
    %v43 = vld [vmem:[#allocation2] sm:$0xf]
    %v44 = vld [vmem:[#allocation2 + $0x4] sm:$0xf]
    %v45 = vld [vmem:[#allocation2 + $0x8] sm:$0xf]
    %v46 = vld [vmem:[#allocation2 + $0xc] sm:$0xf]
    %v47 = vld [vmem:[#allocation4] sm:$0x1]
    %v49 = vlaneseq
    %v50 = vshrl.u32 %v49, 7
    %v51 = vsub.s32 0, %v50
    %v52 = vrot.slane %v47, %v51
    %v58 = vunpack.c.l.b16 %v43
    %v59 = vunpack.c.l.b16 %v44
    %v60 = vunpack.c.l.b16 %v45
    %v61 = vunpack.c.l.b16 %v46
    %v62 = vpack.c.b16 %v59, %v58
    %v63 = vpack.c.b16 %v61, %v60
    %vm66 = vcmask 261120
    %v68 = vsel %vm66, %v42, 0
    %70 = vmatprep.subr.bf16.mxu0 0
    %71 = vmatpush1.bf16.msra.mxu0 %v62
    %72 = vmatprep.subr.bf16.mxu0 0
    %73 = vmatpush1.bf16.msra.mxu0 %v63
    %74 = vmatprep.subr.bf16.mxu0 0
    %75 = vmatpush1.bf16.msra.mxu0 0
    %76 = vmatprep.subr.bf16.mxu0 0
    %77 = vmatpush1.bf16.msra.mxu0 0
    %78 = vmatprep.subr.bf16.mxu0 0
    %79 = vmatpush1.bf16.msra.mxu0 0
    %80 = vmatprep.subr.bf16.mxu0 0
    %81 = vmatpush1.bf16.msra.mxu0 0
    %82 = vmatprep.subr.bf16.mxu0 0
    %83 = vmatpush1.bf16.msra.mxu0 0
    %84 = vmatprep.subr.bf16.mxu0 0
    %85 = vmatpush1.bf16.msra.mxu0 0
    %86 = vmatprep.subr.bf16.mxu0 0
    %87 = vmatpush1.bf16.msra.mxu0 0
    %88 = vmatprep.subr.bf16.mxu0 0
    %89 = vmatpush1.bf16.msra.mxu0 0
    %90 = vmatprep.subr.bf16.mxu0 0
    %91 = vmatpush1.bf16.msra.mxu0 0
    %92 = vmatprep.subr.bf16.mxu0 0
    %93 = vmatpush1.bf16.msra.mxu0 0
    %94 = vmatprep.subr.bf16.mxu0 0
    %95 = vmatpush1.bf16.msra.mxu0 0
    %96 = vmatprep.subr.bf16.mxu0 0
    %97 = vmatpush1.bf16.msra.mxu0 0
    %98 = vmatprep.subr.bf16.mxu0 0
    %99 = vmatpush1.bf16.msra.mxu0 0
    %100 = vmatprep.subr.bf16.mxu0 0
    %101 = vmatpush1.bf16.msra.mxu0 0
    %102 = vmatprep.mubr.bf16.mxu0 0
    %103 = vmatmul.mubr.bf16.gmra.mrb[0].mxu0 %v68
    %v104 = vpop.f32.mrb[0].mxu0
    %v105 = vadd.f32 %v52, %v104
    %v106 = vpop.f32.mrb[0].mxu0
    %v107 = vpop.f32.mrb[0].mxu0
    %v108 = vpop.f32.mrb[0].mxu0
    %109 = vdwg.mxu0
    %v110 = vxor.u32 %v105, 2147483648
    %v111 = vmul.f32 %v110, 1.442695
    %v112 = vpow.pop %v111
    %v113 = vadd.f32 %v112, 1.0
    %v114 = vrcp.pop %v113
    %v115 = vmul.f32 1.0, %v114
    %v116 = vmul.f32 %v105, %v115
    %v117 = vpack.c.bf16 %v116, %v116
    %118 = vst [vmem:[%s3] sm:$0xf] %v117
    // Predicated region
    $region22: #{_time_embedding_fwd.2} parent=1 // pred_check
      _
    $region23: #{_time_embedding_fwd.2} parent=1 // pred_check_branch
      %120 = sbr.rel (0) target = $region25
    $region24: #{_time_embedding_fwd.2} parent=1 // pred_region
      _
    $region25: #{_time_embedding_fwd.2} parent=1 // pred_fallthru
      _
    // Predicated region
    $region26: #{_time_embedding_fwd.2} parent=1 // pred_check
      _
    $region27: #{_time_embedding_fwd.2} parent=1 // pred_check_branch
      %122 = sbr.rel (0) target = $region29
    $region28: #{_time_embedding_fwd.2} parent=1 // pred_region
      _
    $region29: #{_time_embedding_fwd.2} parent=1 // pred_fallthru
      _
    %123 = vsyncpa [#allocation3], 1
    %124 = vsyncpa [#allocation5], 1

// kernel: _time_embedding_fwd.3
$region0: #{_time_embedding_fwd.3}
  #allocation0 [shape = 'u32[]', space=smem, size = 0x4, offset = 0x4, fixed_abs, tag = 'smem constant byte address 0x4 - core index']
  #allocation1 [shape = 'u32[144,128]{1,0:T(1,128)}', space=vmem, size = 0x12000, scoped, tag = 'internal scratch']
  %s0 = inlined_call_operand.vmem [shape: bf16[8,128], index: 0, kind: input, shape index: {}]
  %s1 = inlined_call_operand.vmem [shape: bf16[128,128], index: 1, kind: input, shape index: {}]
  %s2 = inlined_call_operand.vmem [shape: f32[1,128], index: 2, kind: input, shape index: {}]
  %s3 = inlined_call_operand.vmem [shape: bf16[8,128], index: 3, kind: output, shape index: {}]
  %s4 = sld [smem:[#allocation0]]
  $region22: #{_time_embedding_fwd.3} parent=0
    _
  %s6 = ssub.s32 1, %s4
  %s7 = scalar_select 0, %s6, %s4
  // Predicated region
  $region2: #{_time_embedding_fwd.3} parent=0 // pred_check
    _
  $region3: #{_time_embedding_fwd.3} parent=0 // pred_check_branch
    %9 = sbr.rel (0) target = $region5
  $region4: #{_time_embedding_fwd.3} parent=0 // pred_region
    _
  $region5: #{_time_embedding_fwd.3} parent=0 // pred_fallthru
    _
  // Predicated region
  $region6: #{_time_embedding_fwd.3} parent=0 // pred_check
    _
  $region7: #{_time_embedding_fwd.3} parent=0 // pred_check_branch
    %11 = sbr.rel (0) target = $region9
  $region8: #{_time_embedding_fwd.3} parent=0 // pred_region
    _
  $region9: #{_time_embedding_fwd.3} parent=0 // pred_fallthru
    _
  // Predicated region
  $region10: #{_time_embedding_fwd.3} parent=0 // pred_check
    _
  $region11: #{_time_embedding_fwd.3} parent=0 // pred_check_branch
    %13 = sbr.rel (0) target = $region13
  $region12: #{_time_embedding_fwd.3} parent=0 // pred_region
    _
  $region13: #{_time_embedding_fwd.3} parent=0 // pred_fallthru
    _
  %v15 = vld [vmem:[%s0] sm:$0xf]
  %v16 = vld [vmem:[%s1] sm:$0xf]
  %v17 = vld [vmem:[%s1 + $0x4] sm:$0xf]
  %v18 = vld [vmem:[%s1 + $0x8] sm:$0xf]
  %v19 = vld [vmem:[%s1 + $0xc] sm:$0xf]
  %v20 = vld [vmem:[%s1 + $0x10] sm:$0xf]
  %v21 = vld [vmem:[%s1 + $0x14] sm:$0xf]
  %v22 = vld [vmem:[%s1 + $0x18] sm:$0xf]
  %v23 = vld [vmem:[%s1 + $0x1c] sm:$0xf]
  %v24 = vld [vmem:[%s1 + $0x20] sm:$0xf]
  %v25 = vld [vmem:[%s1 + $0x24] sm:$0xf]
  %v26 = vld [vmem:[%s1 + $0x28] sm:$0xf]
  %v27 = vld [vmem:[%s1 + $0x2c] sm:$0xf]
  %v28 = vld [vmem:[%s1 + $0x30] sm:$0xf]
  %v29 = vld [vmem:[%s1 + $0x34] sm:$0xf]
  %v30 = vld [vmem:[%s1 + $0x38] sm:$0xf]
  %v31 = vld [vmem:[%s1 + $0x3c] sm:$0xf]
  %v32 = vld [vmem:[%s2] sm:$0x1]
  %v34 = vlaneseq
  %v35 = vshrl.u32 %v34, 7
  %v36 = vsub.s32 0, %v35
  %v37 = vrot.slane %v32, %v36
  %v55 = vunpack.c.l.b16 %v16
  %v56 = vunpack.c.l.b16 %v17
  %v57 = vunpack.c.l.b16 %v18
  %v58 = vunpack.c.l.b16 %v19
  %v59 = vunpack.c.l.b16 %v20
  %v60 = vunpack.c.l.b16 %v21
  %v61 = vunpack.c.l.b16 %v22
  %v62 = vunpack.c.l.b16 %v23
  %v63 = vunpack.c.l.b16 %v24
  %v64 = vunpack.c.l.b16 %v25
  %v65 = vunpack.c.l.b16 %v26
  %v66 = vunpack.c.l.b16 %v27
  %v67 = vunpack.c.l.b16 %v28
  %v68 = vunpack.c.l.b16 %v29
  %v69 = vunpack.c.l.b16 %v30
  %v70 = vunpack.c.l.b16 %v31
  %v71 = vpack.c.b16 %v56, %v55
  %v72 = vpack.c.b16 %v58, %v57
  %v73 = vpack.c.b16 %v60, %v59
  %v74 = vpack.c.b16 %v62, %v61
  %v75 = vpack.c.b16 %v64, %v63
  %v76 = vpack.c.b16 %v66, %v65
  %v77 = vpack.c.b16 %v68, %v67
  %v78 = vpack.c.b16 %v70, %v69
  %87 = vmatprep.subr.bf16.mxu0 0
  %88 = vmatpush1.bf16.msra.mxu0 %v71
  %89 = vmatprep.subr.bf16.mxu0 0
  %90 = vmatpush1.bf16.msra.mxu0 %v72
  %91 = vmatprep.subr.bf16.mxu0 0
  %92 = vmatpush1.bf16.msra.mxu0 %v73
  %93 = vmatprep.subr.bf16.mxu0 0
  %94 = vmatpush1.bf16.msra.mxu0 %v74
  %95 = vmatprep.subr.bf16.mxu0 0
  %96 = vmatpush1.bf16.msra.mxu0 %v75
  %97 = vmatprep.subr.bf16.mxu0 0
  %98 = vmatpush1.bf16.msra.mxu0 %v76
  %99 = vmatprep.subr.bf16.mxu0 0
  %100 = vmatpush1.bf16.msra.mxu0 %v77
  %101 = vmatprep.subr.bf16.mxu0 0
  %102 = vmatpush1.bf16.msra.mxu0 %v78
  %103 = vmatprep.subr.bf16.mxu0 0
  %104 = vmatpush1.bf16.msra.mxu0 0
  %105 = vmatprep.subr.bf16.mxu0 0
  %106 = vmatpush1.bf16.msra.mxu0 0
  %107 = vmatprep.subr.bf16.mxu0 0
  %108 = vmatpush1.bf16.msra.mxu0 0
  %109 = vmatprep.subr.bf16.mxu0 0
  %110 = vmatpush1.bf16.msra.mxu0 0
  %111 = vmatprep.subr.bf16.mxu0 0
  %112 = vmatpush1.bf16.msra.mxu0 0
  %113 = vmatprep.subr.bf16.mxu0 0
  %114 = vmatpush1.bf16.msra.mxu0 0
  %115 = vmatprep.subr.bf16.mxu0 0
  %116 = vmatpush1.bf16.msra.mxu0 0
  %117 = vmatprep.subr.bf16.mxu0 0
  %118 = vmatpush1.bf16.msra.mxu0 0
  %119 = vmatprep.mubr.bf16.mxu0 0
  %120 = vmatmul.mubr.bf16.gmra.mrb[0].mxu0 %v15
  %v121 = vpop.f32.mrb[0].mxu0
  %v122 = vadd.f32 %v37, %v121
  %v123 = vpop.f32.mrb[0].mxu0
  %v124 = vpop.f32.mrb[0].mxu0
  %v125 = vpop.f32.mrb[0].mxu0
  %126 = vdwg.mxu0
  %v127 = vpack.c.bf16 %v122, %v122
  %128 = vst [vmem:[%s3] sm:$0xf] %v127
  // Predicated region
  $region14: #{_time_embedding_fwd.3} parent=0 // pred_check
    _
  $region15: #{_time_embedding_fwd.3} parent=0 // pred_check_branch
    %130 = sbr.rel (0) target = $region17
  $region16: #{_time_embedding_fwd.3} parent=0 // pred_region
    _
  $region17: #{_time_embedding_fwd.3} parent=0 // pred_fallthru
    _
  // Predicated region
  $region18: #{_time_embedding_fwd.3} parent=0 // pred_check
    _
  $region19: #{_time_embedding_fwd.3} parent=0 // pred_check_branch
    %132 = sbr.rel (0) target = $region21
  $region20: #{_time_embedding_fwd.3} parent=0 // pred_region
    _
  $region21: #{_time_embedding_fwd.3} parent=0 // pred_fallthru
    _

</llo_original>
